<compile_context>
chip_gen: v5e
topology: v5e:2x2
jax: 0.10.0
libtpu: 0.0.40
codegen_flags: <defaults>
</compile_context>

<pallas_src>
import math
from functools import partial

import jax
import jax.numpy as jnp
from jax import lax
from jax.experimental import pallas as pl
from jax.experimental.pallas import tpu as pltpu


# Large finite "-inf" substitute: exp(x - real_max) flushes to exactly 0 in f32
# and (-NEG) - (-NEG) never produces NaN in the online-softmax rescale.
_NEG_FILL = float(jnp.finfo(jnp.float32).min) / 2.0


# ---------------------------------------------------------------------------
# Fused projection kernel:  (B, S, M) @ (M, D) -> (B, S, D)
# ---------------------------------------------------------------------------
def _proj_kernel(x_ref, w_ref, o_ref):
    o_ref[0] = jnp.dot(x_ref[0], w_ref[...],
                       preferred_element_type=jnp.float32).astype(o_ref.dtype)


def _project(x, w, *, seq_tile=128):
    B, S, M = x.shape
    D = w.shape[1]
    ts = min(S, seq_tile)
    assert S % ts == 0, "sequence length must be divisible by the projection tile"
    return pl.pallas_call(
        _proj_kernel,
        out_shape=jax.ShapeDtypeStruct((B, S, D), x.dtype),
        grid_spec=pltpu.PrefetchScalarGridSpec(
            num_scalar_prefetch=0,
            grid=(B, S // ts),
            in_specs=[
                pl.BlockSpec((1, ts, M), lambda b, si: (b, si, 0)),
                pl.BlockSpec((M, D), lambda b, si: (0, 0)),   # weight fetched once
            ],
            out_specs=pl.BlockSpec((1, ts, D), lambda b, si: (b, si, 0)),
        ),
        compiler_params=pltpu.CompilerParams(
            dimension_semantics=("parallel", "parallel")),
    )(x, w)


# ---------------------------------------------------------------------------
# Flash-style multi-head attention kernel over pre-projected Q/K/V.
# Grid = (batch, q_tiles, k_tiles); k_tiles is the innermost "arbitrary" axis.
# ---------------------------------------------------------------------------
def _mha_attn_kernel(blk_any_ref,                       # scalar-prefetch (SMEM)
                     qp_ref, kp_ref, vp_ref, msk_ref,   # inputs
                     wo_ref, bo_ref,
                     out_ref,                            # output
                     m_ref, l_ref, acc_ref,              # scratch (f32)
                     *, heads, key_size, value_size):
    ki = pl.program_id(2)
    nq = pl.num_programs(1)
    nk = pl.num_programs(2)

    @pl.when(ki == 0)
    def _init():
        m_ref[...] = jnp.full(m_ref.shape, -jnp.inf, dtype=m_ref.dtype)
        l_ref[...] = jnp.zeros_like(l_ref)
        acc_ref[...] = jnp.zeros_like(acc_ref)

    # Per-(b, q-tile, k-tile) "any attend" flag -> skip fully-masked blocks.
    blk_idx = (pl.program_id(0) * nq + pl.program_id(1)) * nk + ki

    @pl.when(blk_any_ref[blk_idx] != 0)
    def _body():
        qh = qp_ref[0]                                   # (tq, H*Dk)  bf16
        kh = kp_ref[0]                                   # (tk, H*Dk)  bf16
        vh = vp_ref[0]                                   # (tk, H*Dv)  bf16
        # Additive mask bias computed once per k-tile (1 select instead of H).
        bias = jnp.where(msk_ref[0] != 0, 0.0, _NEG_FILL)    # (tq, tk) f32

        # Read each scratch once (full width), update per-head values in
        # registers, write each scratch back exactly once per k-step.
        m_old = m_ref[...]                               # (tq, H)
        l_old = l_ref[...]                               # (tq, H)
        acc_old = acc_ref[...]                           # (tq, H*Dv)

        m_cols, l_cols, acc_cols = [], [], []
        # NOTE: static loop kept because `heads` is small; per-head temporaries
        # die each iteration (only the small per-head columns are carried).
        for h in range(heads):
            dk = slice(h * key_size, (h + 1) * key_size)
            dv = slice(h * value_size, (h + 1) * value_size)
            # Contract the last dims directly (no transpose); bf16 MXU, f32 acc.
            s = lax.dot_general(qh[:, dk], kh[:, dk],
                                dimension_numbers=(((1,), (1,)), ((), ())),
                                preferred_element_type=jnp.float32)   # (tq, tk)
            s = s + bias
            m_h = m_old[:, h:h + 1]
            m_new = jnp.maximum(m_h, jnp.max(s, axis=-1, keepdims=True))
            alpha = jnp.exp(m_h - m_new)
            p = jnp.exp(s - m_new)                                    # (tq, tk) f32
            l_cols.append(alpha * l_old[:, h:h + 1]
                          + jnp.sum(p, axis=-1, keepdims=True))
            acc_cols.append(alpha * acc_old[:, dv]
                            + jnp.dot(p.astype(vh.dtype), vh[:, dv],
                                      preferred_element_type=jnp.float32))
            m_cols.append(m_new)

        m_ref[...] = jnp.concatenate(m_cols, axis=-1)
        l_ref[...] = jnp.concatenate(l_cols, axis=-1)
        acc_ref[...] = jnp.concatenate(acc_cols, axis=-1)

    @pl.when(ki == nk - 1)
    def _finalize():
        inv = pl.reciprocal(l_ref[...], approx=True)     # (tq, H), EUP slot
        acc = acc_ref[...]                               # (tq, H*Dv)
        normed = jnp.concatenate(
            [acc[:, h * value_size:(h + 1) * value_size] * inv[:, h:h + 1]
             for h in range(heads)], axis=-1)            # (tq, H*Dv) f32
        out = jnp.dot(normed.astype(wo_ref.dtype), wo_ref[...],
                      preferred_element_type=jnp.float32) + bo_ref[...]
        out_ref[0] = out.astype(out_ref.dtype)           # single full store


# ---------------------------------------------------------------------------
# Wrapper
# ---------------------------------------------------------------------------
def multi_head_attention(queries, keys, values, masks,
                         wq, wk, wv, wo, bo, *,
                         q_tile=None, k_tile=None,
                         compute_dtype=jnp.bfloat16):
    """
    queries: (B, Q, M), keys/values: (B, K, M), masks: (B, Q, K) (nonzero = attend)
    wq/wk: (H, M, Dk), wv: (H, M, Dv), wo: (H, Dv, M), bo: (1, M)
    returns: (B, Q, M)
    """
    B, Q, M = queries.shape
    _, K, _ = keys.shape
    H, _, Dk = wq.shape
    Dv = wv.shape[2]

    tq = q_tile if q_tile is not None else min(Q, 128)
    tk = k_tile if k_tile is not None else min(K, 512)   # larger k-tile amortizes per-step overhead
    assert Q % tq == 0 and K % tk == 0, "Q/K must be divisible by the chosen tiles"
    nq, nk = Q // tq, K // tk

    if masks is None:
        masks = jnp.ones((B, Q, K), dtype=jnp.int8)

    cdt = compute_dtype
    scale = 1.0 / math.sqrt(Dk)

    # Fuse per-head weights into lane-dense stacks (wrapper-side layout plumbing);
    # fold the 1/sqrt(Dk) scale into Wq so no in-kernel score scaling is needed.
    wq_all = (jnp.transpose(wq, (1, 0, 2)).reshape(M, H * Dk) * scale).astype(cdt)
    wk_all = jnp.transpose(wk, (1, 0, 2)).reshape(M, H * Dk).astype(cdt)
    wv_all = jnp.transpose(wv, (1, 0, 2)).reshape(M, H * Dv).astype(cdt)
    wo_all = wo.reshape(H * Dv, M).astype(cdt)
    bo_f32 = bo.astype(jnp.float32)

    # Project Q/K/V once each (no redundant K/V projection per q-tile).
    qp = _project(queries.astype(cdt), wq_all)           # (B, Q, H*Dk) bf16
    kp = _project(keys.astype(cdt), wk_all)              # (B, K, H*Dk) bf16
    vp = _project(values.astype(cdt), wv_all)            # (B, K, H*Dv) bf16

    masks_i8 = masks.astype(jnp.int8)                    # 4x less mask traffic than int32
    # Per-(b, qi, ki) "any attend" table for block-level mask skipping.
    blk_any = (masks_i8.reshape(B, nq, tq, nk, tk) != 0).any(axis=(2, 4))
    blk_any = blk_any.astype(jnp.int32).reshape(-1)      # flat SMEM-friendly layout

    kernel = partial(_mha_attn_kernel, heads=H, key_size=Dk, value_size=Dv)

    # TODO(synk): for very large configs on v7x, add pipeline_mode=pl.Buffered(1)
    # on the constant-index Wo spec and an explicit vmem_limit_bytes budget.
    return pl.pallas_call(
        kernel,
        out_shape=jax.ShapeDtypeStruct((B, Q, M), queries.dtype),
        grid_spec=pltpu.PrefetchScalarGridSpec(
            num_scalar_prefetch=1,
            grid=(B, nq, nk),
            in_specs=[
                pl.BlockSpec((1, tq, H * Dk), lambda b, qi, ki, tab: (b, qi, 0)),  # Qp
                pl.BlockSpec((1, tk, H * Dk), lambda b, qi, ki, tab: (b, ki, 0)),  # Kp
                pl.BlockSpec((1, tk, H * Dv), lambda b, qi, ki, tab: (b, ki, 0)),  # Vp
                pl.BlockSpec((1, tq, tk),     lambda b, qi, ki, tab: (b, qi, ki)), # mask
                pl.BlockSpec((H * Dv, M),     lambda b, qi, ki, tab: (0, 0)),      # Wo (fetched once)
                pl.BlockSpec((1, M),          lambda b, qi, ki, tab: (0, 0)),      # bias
            ],
            out_specs=pl.BlockSpec((1, tq, M), lambda b, qi, ki, tab: (b, qi, 0)),
            scratch_shapes=[
                pltpu.VMEM((tq, H), jnp.float32),        # running row max per head
                pltpu.VMEM((tq, H), jnp.float32),        # running denominator per head
                pltpu.VMEM((tq, H * Dv), jnp.float32),   # running weighted values
            ],
        ),
        compiler_params=pltpu.CompilerParams(
            dimension_semantics=("parallel", "parallel", "arbitrary")),
    )(blk_any, qp, kp, vp, masks_i8, wo_all, bo_f32)


# ---------------------------------------------------------------------------
# Plain-JAX reference mirroring the PyTorch module semantics (f32).
# ---------------------------------------------------------------------------
def reference_mha(queries, keys, values, masks, wq, wk, wv, wo, bo):
    H, _, Dk = wq.shape
    heads = []
    for h in range(H):
        qh = queries @ wq[h]
        kh = keys @ wk[h]
        vh = values @ wv[h]
        comp = (qh @ jnp.swapaxes(kh, 1, 2)) / math.sqrt(Dk)
        comp = jnp.where(masks != 0, comp, -jnp.inf)
        w = jax.nn.softmax(comp, axis=2)
        heads.append(w @ vh)
    concat = jnp.concatenate(heads, axis=2)               # (B, Q, H*Dv)
    return concat @ wo.reshape(-1, wo.shape[-1]) + bo[0]


if __name__ == "__main__":
    # Small config sized to exercise multiple q-tiles (parallel axis), multiple
    # k-tiles (online-softmax accumulation) and the block-skipping path.
    B = 2           # batch
    Q = 64          # query count
    K = 256         # key / value count
    M = 32          # model size
    H = 4           # heads
    Dk, Dv = 8, 8   # key size, value size
    dtype = jnp.float32

    key = jax.random.PRNGKey(0)
    ks = jax.random.split(key, 9)

    queries = jax.random.normal(ks[0], (B, Q, M), dtype)
    keys_in = jax.random.normal(ks[1], (B, K, M), dtype)
    values_in = jax.random.normal(ks[2], (B, K, M), dtype)

    # Block-causal style mask: every query attends at least K//Q keys (no fully
    # masked rows); block (qi=0, ki=1) is fully masked -> exercises block skip.
    q_idx = jnp.arange(Q)[:, None]
    k_idx = jnp.arange(K)[None, :]
    masks = (k_idx < (q_idx + 1) * (K // Q)).astype(jnp.int32)
    masks = jnp.broadcast_to(masks[None], (B, Q, K))

    # Parameters stored in x @ W layout (i.e. nn.Linear.weight.T), per head.
    pscale = 0.1
    wq = pscale * jax.random.normal(ks[3], (H, M, Dk), dtype)
    wk = pscale * jax.random.normal(ks[4], (H, M, Dk), dtype)
    wv = pscale * jax.random.normal(ks[5], (H, M, Dv), dtype)
    wo = pscale * jax.random.normal(ks[6], (H, Dv, M), dtype)
    bo = pscale * jax.random.normal(ks[7], (1, M), dtype)

    out = multi_head_attention(queries, keys_in, values_in, masks,
                               wq, wk, wv, wo, bo,
                               q_tile=32, k_tile=128)
    out = jax.block_until_ready(out)

    ref = reference_mha(queries, keys_in, values_in, masks, wq, wk, wv, wo, bo)
    assert out.shape == (B, Q, M)
    # Tolerance accounts for bf16 MXU operands + EUP approximate reciprocal
    # (accumulation and softmax state remain f32).
    assert jnp.allclose(out, ref, atol=2e-2, rtol=2e-2), "mismatch vs reference"

    print("KERNEL_OK")
</pallas_src>

<mosaic_0001>
module attributes {stable_mosaic.version = 11 : i64} {
  func.func @_proj_kernel(%arg0: i32, %arg1: i32, %arg2: memref<1x64x32xbf16, #tpu.memory_space<vmem>>, %arg3: memref<32x32xbf16, #tpu.memory_space<vmem>>, %arg4: memref<1x64x32xbf16, #tpu.memory_space<vmem>>) attributes {dimension_semantics = [#tpu.dimension_semantics<parallel>, #tpu.dimension_semantics<parallel>], iteration_bounds = array<i64: 2, 1>, scalar_prefetch = 0 : i64, scratch_operands = 0 : i64, tpu.core_type = #tpu.core_type<tc>, window_params = [{transform_indices = @transform_0, window_bounds = array<i64: 1, 64, 32>}, {pipeline_mode = #tpu.pipeline_mode<synchronous>, transform_indices = @transform_1, window_bounds = array<i64: 32, 32>}, {transform_indices = @transform_2, window_bounds = array<i64: 1, 64, 32>}]} {
    %c0 = arith.constant 0 : index
    %c0_0 = arith.constant 0 : index
    %c0_1 = arith.constant 0 : index
    %0 = vector.load %arg2[%c0, %c0_0, %c0_1] : memref<1x64x32xbf16, #tpu.memory_space<vmem>>, vector<1x64x32xbf16>
    %1 = vector.shape_cast %0 : vector<1x64x32xbf16> to vector<64x32xbf16>
    %c0_2 = arith.constant 0 : index
    %c0_3 = arith.constant 0 : index
    %2 = vector.load %arg3[%c0_2, %c0_3] : memref<32x32xbf16, #tpu.memory_space<vmem>>, vector<32x32xbf16>
    %cst = arith.constant dense<0.000000e+00> : vector<64x32xf32>
    %3 = tpu.matmul %1, %2, %cst {dimension_numbers = #tpu.dot_dimension_numbers<[1], [0], [0], [1], [0, 0, 1, 1], [], []>} : vector<64x32xbf16>, vector<32x32xbf16>, vector<64x32xf32> -> vector<64x32xf32>
    %4 = arith.truncf %3 : vector<64x32xf32> to vector<64x32xbf16>
    %c0_4 = arith.constant 0 : index
    %c0_5 = arith.constant 0 : index
    %c0_6 = arith.constant 0 : index
    %5 = vector.load %arg4[%c0_4, %c0_5, %c0_6] : memref<1x64x32xbf16, #tpu.memory_space<vmem>>, vector<1x64x32xbf16>
    %6 = vector.shape_cast %5 : vector<1x64x32xbf16> to vector<64x32xbf16>
    %7 = vector.shape_cast %4 : vector<64x32xbf16> to vector<1x64x32xbf16>
    tpu.vector_store %arg4[%c0_4, %c0_5, %c0_6], %7 {strides = array<i32>} : memref<1x64x32xbf16, #tpu.memory_space<vmem>>, vector<1x64x32xbf16>,
    return
  }
  func.func @transform_0(%arg0: i32, %arg1: i32) -> (i32, i32, i32) {
    %c0_i32 = arith.constant 0 : i32
    %c0_i32_0 = arith.constant 0 : i32
    return %arg0, %arg1, %c0_i32 : i32, i32, i32
  }
  func.func @transform_1(%arg0: i32, %arg1: i32) -> (i32, i32) {
    %c0_i32 = arith.constant 0 : i32
    %c0_i32_0 = arith.constant 0 : i32
    %c0_i32_1 = arith.constant 0 : i32
    return %c0_i32, %c0_i32_0 : i32, i32
  }
  func.func @transform_2(%arg0: i32, %arg1: i32) -> (i32, i32, i32) {
    %c0_i32 = arith.constant 0 : i32
    %c0_i32_0 = arith.constant 0 : i32
    return %arg0, %arg1, %c0_i32 : i32, i32, i32
  }
}

</mosaic_0001>

<llo_original>
// kernel: tpu_custom_call.1
$region0: #{tpu_custom_call.1}
  #allocation0 [shape = 'u32[]', space=smem, size = 0x4, offset = 0x4, fixed_abs, tag = 'smem constant byte address 0x4 - core index']
  #allocation1 [shape = 'u32[72,128]{1,0:T(1,128)}', space=vmem, size = 0x9000, scoped, tag = 'internal scratch']
  %s0 = inlined_call_operand.vmem [shape: bf16[2,64,32], index: 0, kind: input, shape index: {}]
  %s1 = inlined_call_operand.vmem [shape: bf16[32,32], index: 1, kind: input, shape index: {}]
  %s2 = inlined_call_operand.vmem [shape: bf16[2,64,32], index: 2, kind: output, shape index: {}]
  %s3 = sld [smem:[#allocation0]]
  $region41: #{tpu_custom_call.1} parent=0
    _
  %s5 = ssub.s32 1, %s3
  %s6 = scalar_select 0, %s5, %s3
  loop: start=0, step=1, limit=4
  $region2: #{tpu_custom_call.1} parent=0 // loop_pre_header
    _
  $region3: #{tpu_custom_call.1} parent=0 // loop_header
    %s8 = sphi 0, %s12
    %p9 = scmp.ge.s32.totalorder %s8, 4
    %s15 = sphi 0, %s27
    %s16 = sphi 0, %s23
    %s17 = sphi 0, %s15
    %s18 = sphi 0, %s16
    %s19 = sphi 0, %s17
    %s20 = sphi 0, %s18
    %s32 = sphi 0, %s34
    %s35 = sphi 0, %s32
    %s36 = sphi 0, %s35
    %s52 = sphi 0, %s36
    %s56 = sphi 0, %s56
    %s58 = sphi 0, %s56
    %s59 = sphi 0, %s58
    %s73 = sphi 0, %s59
    %s81 = sphi 0, %s83
    %s84 = sphi 0, %s81
    %s85 = sphi 0, %s84
    %s101 = sphi 0, %s85
  $region4: #{tpu_custom_call.1} parent=0 // loop_header_branch
    %11 = sbr.rel (%p9) target = $region8
  $region5: #{tpu_custom_call.1} parent=0 // loop_body
    %s13 = ssub.s32 %s8, 1
    %s14 = ssub.s32 %s8, 2
    %s21 = sadd.s32 1, %s16
    %p22 = scmp.ge.s32.totalorder %s21, 1
    %s23 = scalar_select %p22, 0, %s21
    %s24 = sadd.s32 1, %s15
    %s25 = scalar_select %p22, %s24, %s15
    %p26 = scmp.ge.s32.totalorder %s25, 2
    %s27 = scalar_select %p26, 0, %s25
    %s28 = ssub.s32 %s15, %s27
    %s29 = ssub.s32 %s16, %s23
    %s30 = sor.u32 %s28, %s29
    %p31 = scmp.eq.s32.totalorder %s30, 0
    %s33 = sadd.s32 %s32, 1
    %s34 = scalar_select %p31, %s32, %s33
    %p37 = pneg %p31
    %p38 = scmp.eq.s32.totalorder %s8, 1
    %p39 = por %p37, %p38
    %p40 = scmp.ne.s32.totalorder %s32, %s35
    %p41 = scmp.eq.s32.totalorder %s8, 0
    %p42 = por %p40, %p41
    %p43 = scmp.ne.s32.totalorder %s32, %s35
    %p44 = scmp.eq.s32.totalorder %s13, 1
    %p45 = por %p43, %p44
    %p46 = scmp.ne.s32.totalorder %s35, %s36
    %p47 = scmp.eq.s32.totalorder %s13, 0
    %p48 = por %p46, %p47
    %p49 = scmp.ne.s32.totalorder %s35, %s36
    %p50 = scmp.eq.s32.totalorder %s14, 1
    %p51 = por %p49, %p50
    %p53 = scmp.ne.s32.totalorder %s36, %s52
    %p54 = scmp.eq.s32.totalorder %s14, 0
    %p55 = por %p53, %p54
    %s57 = sadd.s32 %s56, 1
    %p60 = scmp.eq.s32.totalorder %s8, 1
    %p61 = scmp.ne.s32.totalorder %s56, %s58
    %p62 = scmp.eq.s32.totalorder %s8, 0
    %p63 = por %p61, %p62
    %p64 = scmp.ne.s32.totalorder %s56, %s58
    %p65 = scmp.eq.s32.totalorder %s13, 1
    %p66 = por %p64, %p65
    %p67 = scmp.ne.s32.totalorder %s58, %s59
    %p68 = scmp.eq.s32.totalorder %s13, 0
    %p69 = por %p67, %p68
    %p70 = scmp.ne.s32.totalorder %s58, %s59
    %p71 = scmp.eq.s32.totalorder %s14, 1
    %p72 = por %p70, %p71
    %p74 = scmp.ne.s32.totalorder %s59, %s73
    %p75 = scmp.eq.s32.totalorder %s14, 0
    %p76 = por %p74, %p75
    %s77 = ssub.s32 %s15, %s27
    %s78 = ssub.s32 %s16, %s23
    %s79 = sor.u32 %s77, %s78
    %p80 = scmp.eq.s32.totalorder %s79, 0
    %s82 = sadd.s32 %s81, 1
    %s83 = scalar_select %p80, %s81, %s82
    %p86 = pneg %p80
    %p87 = scmp.eq.s32.totalorder %s8, 1
    %p88 = por %p86, %p87
    %p89 = scmp.ne.s32.totalorder %s81, %s84
    %p90 = scmp.eq.s32.totalorder %s8, 0
    %p91 = por %p89, %p90
    %p92 = scmp.ne.s32.totalorder %s81, %s84
    %p93 = scmp.eq.s32.totalorder %s13, 1
    %p94 = por %p92, %p93
    %p95 = scmp.ne.s32.totalorder %s84, %s85
    %p96 = scmp.eq.s32.totalorder %s13, 0
    %p97 = por %p95, %p96
    %p98 = scmp.ne.s32.totalorder %s84, %s85
    %p99 = scmp.eq.s32.totalorder %s14, 1
    %p100 = por %p98, %p99
    %p102 = scmp.ne.s32.totalorder %s85, %s101
    %p103 = scmp.eq.s32.totalorder %s14, 0
    %p104 = por %p102, %p103
    %p105 = scmp.le.s32.totalorder 1, %s8
    %p106 = scmp.lt.s32.totalorder %s8, 3
    %p107 = pnand %p105, %p106
    %p108 = pneg %p107
    // Predicated region
    $region9: #{tpu_custom_call.1} parent=5 // pred_check
      _
    $region10: #{tpu_custom_call.1} parent=5 // pred_check_branch
      %110 = sbr.rel (%p107) target = $region12
    $region11: #{tpu_custom_call.1} parent=5 // pred_region
      %s111 = ssub.s32 %s8, 1
      // Predicated region
      $region13: #{tpu_custom_call.1} parent=11 // pred_check
        %p112 = pneg %p69
      $region14: #{tpu_custom_call.1} parent=11 // pred_check_branch
        %114 = sbr.rel (%p112) target = $region16
      $region15: #{tpu_custom_call.1} parent=11 // pred_region
        _
      $region16: #{tpu_custom_call.1} parent=11 // pred_fallthru
        _
    $region12: #{tpu_custom_call.1} parent=5 // pred_fallthru
      _
    %p115 = scmp.lt.s32.totalorder %s8, 2
    // Predicated region
    $region17: #{tpu_custom_call.1} parent=5 // pred_check
      %p116 = pneg %p115
    $region18: #{tpu_custom_call.1} parent=5 // pred_check_branch
      %118 = sbr.rel (%p116) target = $region20
    $region19: #{tpu_custom_call.1} parent=5 // pred_region
      // Predicated region
      $region21: #{tpu_custom_call.1} parent=19 // pred_check
        %p119 = pneg %p42
      $region22: #{tpu_custom_call.1} parent=19 // pred_check_branch
        %121 = sbr.rel (%p119) target = $region24
      $region23: #{tpu_custom_call.1} parent=19 // pred_region
        %s122 = smul.u32 8, %s16
        %p123 = scmp.lt.s32.totalorder %s15, 1
        %s124 = scalar_select %p123, %s15, 1
        %p125 = scmp.lt.s32.totalorder %s122, 7
        %s126 = scalar_select %p125, %s122, 7
        %s127 = smul.addr %s124, 8
        %s128 = sadd.s32 %s126, %s127
        %s129 = smul.addr %s128, 4
        %s130 = scalar_lea.vmem %s0, %s129
        %s131 = smul.u32 8, %s16
      $region24: #{tpu_custom_call.1} parent=19 // pred_fallthru
        _
    $region20: #{tpu_custom_call.1} parent=5 // pred_fallthru
      _
    %p132 = scmp.le.s32.totalorder 1, %s8
    %p133 = scmp.lt.s32.totalorder %s8, 3
    %p134 = pnand %p132, %p133
    %p135 = pneg %p134
    // Predicated region
    $region25: #{tpu_custom_call.1} parent=5 // pred_check
      _
    $region26: #{tpu_custom_call.1} parent=5 // pred_check_branch
      %137 = sbr.rel (%p134) target = $region28
    $region27: #{tpu_custom_call.1} parent=5 // pred_region
      %s138 = ssub.s32 %s8, 1
      %s139 = smul.u32 8, %s18
      %p140 = scmp.lt.s32.totalorder %s17, 1
      %s141 = scalar_select %p140, %s17, 1
      %p142 = scmp.lt.s32.totalorder %s139, 7
      %s143 = scalar_select %p142, %s139, 7
      %s144 = smul.addr %s141, 8
      %s145 = sadd.s32 %s143, %s144
      %s146 = smul.addr %s145, 4
      %s147 = scalar_lea.vmem %s0, %s146
      %p148 = pneg %p48
      %p149 = pneg %p45
      %p150 = pneg %p69
      %p151 = pneg %p66
      %p152 = pneg %p97
      %p153 = pneg %p94
      %s154 = smul.u32 8, %s18
      %p155 = scmp.lt.s32.totalorder %s17, 1
      %s156 = scalar_select %p155, %s17, 1
      %p157 = scmp.lt.s32.totalorder %s154, 7
      %s158 = scalar_select %p157, %s154, 7
      %s159 = smul.addr %s156, 8
      %s160 = sadd.s32 %s158, %s159
      %s161 = smul.addr %s160, 4
      %s162 = scalar_lea.vmem %s2, %s161
      %s163 = smul.u32 8, %s18
      %p164 = scmp.lt.s32.totalorder %s17, 1
      %s165 = scalar_select %p164, %s17, 1
      %p166 = scmp.lt.s32.totalorder %s163, 7
      %s167 = scalar_select %p166, %s163, 7
      %s168 = smul.addr %s165, 8
      %s169 = sadd.s32 %s167, %s168
      %s170 = smul.addr %s169, 4
      %s171 = scalar_lea.vmem %s0, %s170
      %s172 = smul.u32 8, %s18
      %s173 = smul.u32 8, %s18
      %p174 = scmp.lt.s32.totalorder %s17, 1
      %s175 = scalar_select %p174, %s17, 1
      %p176 = scmp.lt.s32.totalorder %s173, 7
      %s177 = scalar_select %p176, %s173, 7
      %s178 = smul.addr %s175, 8
      %s179 = sadd.s32 %s177, %s178
      %s180 = smul.addr %s179, 4
      %s181 = scalar_lea.vmem %s2, %s180
      %s182 = smul.u32 8, %s18
      %v184 = vld [vmem:[%s171] sm:$0xf]
      %v185 = vld [vmem:[%s171 + $0x4] sm:$0xf]
      %v186 = vld [vmem:[%s171 + $0x8] sm:$0xf]
      %v187 = vld [vmem:[%s171 + $0xc] sm:$0xf]
      %v188 = vld [vmem:[%s171 + $0x10] sm:$0xf]
      %v189 = vld [vmem:[%s171 + $0x14] sm:$0xf]
      %v190 = vld [vmem:[%s171 + $0x18] sm:$0xf]
      %v191 = vld [vmem:[%s171 + $0x1c] sm:$0xf]
      %v192 = vld [vmem:[%s1] sm:$0xf]
      %v193 = vld [vmem:[%s1 + $0x4] sm:$0xf]
      %v194 = vld [vmem:[%s1 + $0x8] sm:$0xf]
      %v195 = vld [vmem:[%s1 + $0xc] sm:$0xf]
      %v204 = vunpack.c.l.b16 %v184
      %v205 = vunpack.c.l.b16 %v185
      %v206 = vunpack.c.l.b16 %v186
      %v207 = vunpack.c.l.b16 %v187
      %v208 = vunpack.c.l.b16 %v188
      %v209 = vunpack.c.l.b16 %v189
      %v210 = vunpack.c.l.b16 %v190
      %v211 = vunpack.c.l.b16 %v191
      %v212 = vpack.c.b16 %v205, %v204
      %v213 = vpack.c.b16 %v207, %v206
      %v214 = vpack.c.b16 %v209, %v208
      %v215 = vpack.c.b16 %v211, %v210
      %v220 = vunpack.c.l.b16 %v192
      %v221 = vunpack.c.l.b16 %v193
      %v222 = vunpack.c.l.b16 %v194
      %v223 = vunpack.c.l.b16 %v195
      %v224 = vpack.c.b16 %v221, %v220
      %v225 = vpack.c.b16 %v223, %v222
      %vm228 = vcmask 261120
      %v230 = vsel %vm228, %v212, 0
      %v233 = vsel %vm228, %v213, 0
      %v236 = vsel %vm228, %v214, 0
      %v239 = vsel %vm228, %v215, 0
      %241 = vmatpush.bf16.msra.mxu0 0
      %242 = vmatpush.bf16.msra.mxu0 0
      %243 = vmatpush.bf16.msra.mxu0 0
      %244 = vmatpush.bf16.msra.mxu0 0
      %245 = vmatpush.bf16.msra.mxu0 0
      %246 = vmatpush.bf16.msra.mxu0 0
      %247 = vmatpush.bf16.msra.mxu0 %v225
      %248 = vmatpush.bf16.msra.mxu0 %v224
      %249 = vmatmul.bf16.gmra.mxu0 %v230
      %v250 = vpop.f32.mrf.mxu0
      %v251 = vadd.f32 0.0, %v250
      %v252 = vpop.f32.mrf.mxu0
      %v253 = vadd.f32 0.0, %v252
      %254 = vmatmul.bf16.gmra.mxu0 %v233
      %v255 = vpop.f32.mrf.mxu0
      %v256 = vadd.f32 0.0, %v255
      %v257 = vpop.f32.mrf.mxu0
      %v258 = vadd.f32 0.0, %v257
      %259 = vmatmul.bf16.gmra.mxu0 %v236
      %v260 = vpop.f32.mrf.mxu0
      %v261 = vadd.f32 0.0, %v260
      %v262 = vpop.f32.mrf.mxu0
      %v263 = vadd.f32 0.0, %v262
      %264 = vmatmul.bf16.gmra.mxu0 %v239
      %v265 = vpop.f32.mrf.mxu0
      %v266 = vadd.f32 0.0, %v265
      %v267 = vpop.f32.mrf.mxu0
      %v268 = vadd.f32 0.0, %v267
      %269 = vdwg.mxu0
      %v270 = vpack.c.bf16 %v251, %v251
      %v271 = vpack.c.bf16 %v253, %v253
      %v272 = vpack.c.bf16 %v256, %v256
      %v273 = vpack.c.bf16 %v258, %v258
      %v274 = vpack.c.bf16 %v261, %v261
      %v275 = vpack.c.bf16 %v263, %v263
      %v276 = vpack.c.bf16 %v266, %v266
      %v277 = vpack.c.bf16 %v268, %v268
      %vm278 = vcmask 257024
      %279 = vst.msk [vmem:[%s181] sm:$0xf] %vm278, %v270
      %280 = vst.msk [vmem:[%s181 + $0x4] sm:$0xf] %vm278, %v271
      %281 = vst.msk [vmem:[%s181 + $0x8] sm:$0xf] %vm278, %v272
      %282 = vst.msk [vmem:[%s181 + $0xc] sm:$0xf] %vm278, %v273
      %283 = vst.msk [vmem:[%s181 + $0x10] sm:$0xf] %vm278, %v274
      %284 = vst.msk [vmem:[%s181 + $0x14] sm:$0xf] %vm278, %v275
      %285 = vst.msk [vmem:[%s181 + $0x18] sm:$0xf] %vm278, %v276
      %286 = vst.msk [vmem:[%s181 + $0x1c] sm:$0xf] %vm278, %v277
      %s287 = smul.u32 8, %s18
      %p288 = scmp.lt.s32.totalorder %s17, 1
      %s289 = scalar_select %p288, %s17, 1
      %p290 = scmp.lt.s32.totalorder %s287, 7
      %s291 = scalar_select %p290, %s287, 7
      %s292 = smul.addr %s289, 8
      %s293 = sadd.s32 %s291, %s292
      %s294 = smul.addr %s293, 4
      %s295 = scalar_lea.vmem %s2, %s294
      // Predicated region
      $region29: #{tpu_custom_call.1} parent=27 // pred_check
        %p296 = pneg %p94
      $region30: #{tpu_custom_call.1} parent=27 // pred_check_branch
        %298 = sbr.rel (%p296) target = $region32
      $region31: #{tpu_custom_call.1} parent=27 // pred_region
        %s299 = smul.u32 8, %s18
      $region32: #{tpu_custom_call.1} parent=27 // pred_fallthru
        _
    $region28: #{tpu_custom_call.1} parent=5 // pred_fallthru
      _
    %p300 = scmp.le.s32.totalorder 2, %s8
    // Predicated region
    $region33: #{tpu_custom_call.1} parent=5 // pred_check
      %p301 = pneg %p300
    $region34: #{tpu_custom_call.1} parent=5 // pred_check_branch
      %303 = sbr.rel (%p301) target = $region36
    $region35: #{tpu_custom_call.1} parent=5 // pred_region
      %s304 = ssub.s32 %s8, 2
      // Predicated region
      $region37: #{tpu_custom_call.1} parent=35 // pred_check
        %p305 = pneg %p100
      $region38: #{tpu_custom_call.1} parent=35 // pred_check_branch
        %307 = sbr.rel (%p305) target = $region40
      $region39: #{tpu_custom_call.1} parent=35 // pred_region
        %s308 = smul.u32 8, %s20
        %p309 = scmp.lt.s32.totalorder %s19, 1
        %s310 = scalar_select %p309, %s19, 1
        %p311 = scmp.lt.s32.totalorder %s308, 7
        %s312 = scalar_select %p311, %s308, 7
        %s313 = smul.addr %s310, 8
        %s314 = sadd.s32 %s312, %s313
        %s315 = smul.addr %s314, 4
        %s316 = scalar_lea.vmem %s2, %s315
      $region40: #{tpu_custom_call.1} parent=35 // pred_fallthru
        _
    $region36: #{tpu_custom_call.1} parent=5 // pred_fallthru
      _
  $region6: #{tpu_custom_call.1} parent=0 // loop_footer
    %s12 = sadd.s32 1, %s8
  $region7: #{tpu_custom_call.1} parent=0 // loop_footer_branch
    %7 = sbr.rel target = $region3
  $region8: #{tpu_custom_call.1} parent=0 // loop_exit
    _

</llo_original>
